<compile_context>
chip_gen: v6e
topology: v6e:2x2x1
jax: 0.10.0
libtpu: 0.0.40
codegen_flags: <defaults>
</compile_context>

<pallas_src>
import functools
import math

import jax
import jax.numpy as jnp
from jax.experimental import pallas as pl
from jax.experimental.pallas import tpu as pltpu

NUM_SUBSET = 3


def _round_up(x, m):
    return ((x + m - 1) // m) * m


def _default_max_lanes():
    """MXU-native contraction/output width: 128 up to v5e, 256 on v6e/v7x."""
    try:
        kind = jax.devices()[0].device_kind.lower()
    except Exception:
        return 256
    for tag in ("v2", "v3", "v4", "v5"):
        if tag in kind:
            return 128
    return 256


def _choose_tiling(T, V, max_lanes):
    """Pick (t_blk, V_pad, L) with L = t_blk*V_pad, L % 128 == 0, T % t_blk == 0.

    Prefers no vertex padding; caps L at the MXU native width so the
    block-diagonal vertex mix never burns extra MXU passes.  When no divisor of
    T works (real graphs: V=25/18), zero-pads V minimally instead of growing
    t_blk (which would blow up the (L, L) adjacency)."""
    max_lanes = max(int(max_lanes), 128)
    # (a) no padding: largest divisor t of T with (t*V) % 128 == 0, t*V <= max_lanes.
    best = None
    for t in range(1, T + 1):
        if T % t:
            continue
        lanes = t * V
        if lanes % 128 == 0 and lanes <= max_lanes:
            best = (t, V, lanes)
    if best is not None:
        return best
    # (b) zero-pad V: minimise V_pad (x/out DMA waste); ties -> larger L (<= max_lanes).
    best = None
    lanes = 128
    upper = max(max_lanes, _round_up(V, 128))
    while lanes <= upper:
        t_best = 0
        for t in range(1, min(T, lanes) + 1):
            if T % t == 0 and lanes % t == 0 and lanes // t >= V:
                t_best = t
        if t_best:
            v_pad = lanes // t_best
            if best is None or v_pad <= best[1]:
                best = (t_best, v_pad, lanes)
        lanes += 128
    if best is None:  # unreachable; safe fallback: one frame per block.
        v_pad = _round_up(V, 128)
        best = (1, v_pad, v_pad)
    return best


def _choose_chunks_per_step(n_tb, lanes, n_batch, lane_budget=2048, min_grid_steps=8):
    """# of L-lane chunks per grid step: big slabs amortise DMA/step overhead,
    but keep >= ~min_grid_steps grid steps when possible (feeds both v7x TCs)."""
    divs = [k for k in range(1, n_tb + 1) if n_tb % k == 0 and k * lanes <= lane_budget]
    if not divs:
        return 1
    ok = [k for k in divs if n_batch * (n_tb // k) >= min_grid_steps]
    return max(ok) if ok else max(divs)


def _gcn_kernel(x_ref, w_ref, bd_ref, bias_ref, o_ref, *, n_chunks, lanes, vertex_first):
    """One (batch, frame-superblock) grid step.

    x_ref   : (1, C, n_chunks*lanes)  input slab (compute dtype), lanes = t_blk*V_pad
    w_ref   : (4, O, C)               BN-scaled 1x1-conv weights; plane 3 = residual conv
    bd_ref  : (3, lanes, lanes)       frame-block-diagonal adjacency I_{t_blk} (x) A_eff[i]
    bias_ref: (O, 1) f32              folded conv biases + BN shifts (main + residual)
    o_ref   : (1, O, n_chunks*lanes)  f32 output slab (lane-dense stores)
    """
    # Hoist the bias broadcast once (JAX does not CSE broadcast_in_dim).
    bias = jnp.broadcast_to(bias_ref[...], (bias_ref.shape[0], lanes))
    for j in range(n_chunks):
        lo, hi = j * lanes, (j + 1) * lanes
        xj = x_ref[0, :, lo:hi]                                            # (C, L)
        # Residual branch: channel mix only (BN_r already folded into w_ref[3]).
        acc = jnp.dot(w_ref[3], xj, preferred_element_type=jnp.float32)    # (O, L) f32
        for i in range(NUM_SUBSET):
            if vertex_first:
                # C <= O: vertex mix on C rows first (cheaper dominant term).
                y = jnp.dot(xj, bd_ref[i],
                            preferred_element_type=jnp.float32).astype(xj.dtype)
                acc = acc + jnp.dot(w_ref[i], y, preferred_element_type=jnp.float32)
            else:
                # O < C: channel mix first, vertex mix on O rows.
                h = jnp.dot(w_ref[i], xj,
                            preferred_element_type=jnp.float32).astype(xj.dtype)
                acc = acc + jnp.dot(h, bd_ref[i], preferred_element_type=jnp.float32)
        # f32 epilogue (bias add + ReLU), lane-dense store.
        o_ref[0, :, lo:hi] = jnp.maximum(acc + bias, 0.0).astype(o_ref.dtype)


def graph_convolution(x, W, b, A, bn_scale, bn_shift, Wr, br, bnr_scale, bnr_shift,
                      *, compute_dtype=jnp.bfloat16, max_lanes=None, lane_budget=2048):
    """ST-GCN GraphConvolution forward (eval-mode BatchNorm).

    x        : (N, C, T, V) float32
    W        : (3, O, C)    1x1 conv weights (one per adjacency subset)
    b        : (3, O)       conv biases
    A        : (3, V, V)    adjacency * graph_attn
    bn_scale : (O,)         gamma / sqrt(running_var + eps)        (main BN)
    bn_shift : (O,)         beta - running_mean * bn_scale
    Wr, br   : (O, C), (O,) residual 1x1 conv (in_channels != out_channels)
    bnr_*    : (O,)         residual-branch BN folded the same way
    compute_dtype : MXU operand dtype (bf16 default); accumulation + epilogue stay f32
    returns  : (N, O, T, V) float32
    """
    N, C, T, V = x.shape
    O = W.shape[1]
    f32 = jnp.float32

    if max_lanes is None:
        max_lanes = _default_max_lanes()
    t_blk, V_pad, L = _choose_tiling(T, V, max_lanes)
    n_tb = T // t_blk
    K = _choose_chunks_per_step(n_tb, L, N, lane_budget=lane_budget)
    n_super = n_tb // K
    slab = K * L

    # Stage order: keep the dominant (., L)@(L, L) vertex mix on min(C, O) rows.
    vertex_first = C <= O

    # ---- fold BN scales into the conv weights; stack as (4, O, C) planes ------
    w_stack = jnp.stack(
        [W[i].astype(f32) * bn_scale[:, None] for i in range(NUM_SUBSET)]
        + [Wr.astype(f32) * bnr_scale[:, None]], axis=0).astype(compute_dtype)   # (4, O, C)
    bias = (bn_scale * jnp.sum(b, axis=0) + bn_shift
            + bnr_scale * br + bnr_shift)[:, None].astype(f32)                   # (O, 1)

    # ---- frame-block-diagonal adjacency I_{t_blk} (x) A_i, vertex-padded ------
    A_p = A.astype(f32)
    if V_pad != V:
        A_p = jnp.pad(A_p, ((0, 0), (0, V_pad - V), (0, V_pad - V)))
    eye = jnp.eye(t_blk, dtype=f32)
    bd = jnp.stack([jnp.kron(eye, A_p[i]) for i in range(NUM_SUBSET)],
                   axis=0).astype(compute_dtype)                                 # (3, L, L)

    # ---- input: cast, zero-pad vertices, flatten time*vertex into lanes -------
    x_c = x.astype(compute_dtype)
    if V_pad != V:
        x_c = jnp.pad(x_c, ((0, 0), (0, 0), (0, 0), (0, V_pad - V)))
    x_flat = x_c.reshape(N, C, T * V_pad)

    # ---- VMEM budget derived from the actual blocks (double-buffered) ---------
    itemsize = jnp.dtype(compute_dtype).itemsize
    block_bytes = (2 * C * slab * itemsize            # x slab
                   + 2 * O * slab * 4                 # f32 output slab
                   + 2 * (bd.size + w_stack.size) * itemsize
                   + 2 * bias.size * 4)
    vmem_limit = int(min(max(2 * block_bytes + (8 << 20), 16 << 20), 64 << 20))

    kernel = functools.partial(_gcn_kernel, n_chunks=K, lanes=L,
                               vertex_first=vertex_first)

    out_flat = pl.pallas_call(
        kernel,
        out_shape=jax.ShapeDtypeStruct((N, O, T * V_pad), f32),
        grid_spec=pltpu.PrefetchScalarGridSpec(
            num_scalar_prefetch=0,
            grid=(N, n_super),
            in_specs=[
                pl.BlockSpec((1, C, slab), lambda n, t: (n, 0, t)),              # x slab
                pl.BlockSpec((4, O, C), lambda n, t: (0, 0, 0)),                 # folded weights
                pl.BlockSpec((NUM_SUBSET, L, L), lambda n, t: (0, 0, 0)),        # block-diag A
                pl.BlockSpec((O, 1), lambda n, t: (0, 0)),                       # folded bias
            ],
            out_specs=pl.BlockSpec((1, O, slab), lambda n, t: (n, 0, t)),
        ),
        compiler_params=pltpu.CompilerParams(
            dimension_semantics=("parallel", "parallel"),
            vmem_limit_bytes=vmem_limit),
    )(x_flat, w_stack, bd, bias)

    out = out_flat.reshape(N, O, T, V_pad)
    if V_pad != V:
        out = out[:, :, :, :V]
    return out


# ----------------------------- reference / tests -------------------------------

def _fold_bn(gamma, beta, mean, var, eps=1e-5):
    scale = gamma / jnp.sqrt(var + eps)
    shift = beta - mean * scale
    return scale.astype(jnp.float32), shift.astype(jnp.float32)


def reference(x, W, b, A, bn_scale, bn_shift, Wr, br, bnr_scale, bnr_shift):
    """Pure-JAX reference matching the PyTorch forward (eval-mode BN)."""
    N, C, T, V = x.shape
    O = W.shape[1]
    xa = x.reshape(N, C * T, V)
    s = None
    for i in range(NUM_SUBSET):
        y = jnp.matmul(xa, A[i]).reshape(N, C, T, V)
        z = jnp.einsum('oc,nctv->notv', W[i], y) + b[i].reshape(1, O, 1, 1)
        s = z if s is None else s + z
    s = s * bn_scale.reshape(1, O, 1, 1) + bn_shift.reshape(1, O, 1, 1)
    r = jnp.einsum('oc,nctv->notv', Wr, x) + br.reshape(1, O, 1, 1)
    r = r * bnr_scale.reshape(1, O, 1, 1) + bnr_shift.reshape(1, O, 1, 1)
    return jnp.maximum(s + r, 0.0)


def _make_case(key, N, C, O, T, V, trained_bn=True):
    """Inputs following the module's init_weights distributions."""
    ks = jax.random.split(key, 12)
    x = jax.random.normal(ks[0], (N, C, T, V), jnp.float32)
    A = jax.random.uniform(ks[1], (NUM_SUBSET, V, V), jnp.float32)
    graph_attn = jnp.ones_like(A)              # init_weights sets graph_attn = 1
    A_eff = A * graph_attn
    std_g = math.sqrt(2.0 / (O * C * 1 * 1 * NUM_SUBSET))
    W = jax.random.normal(ks[2], (NUM_SUBSET, O, C), jnp.float32) * std_g
    b = jnp.zeros((NUM_SUBSET, O), jnp.float32)
    Wr = jax.random.normal(ks[3], (O, C), jnp.float32) * math.sqrt(2.0 / O)
    br = jnp.zeros((O,), jnp.float32)
    if trained_bn:  # non-degenerate BN so main-branch numerics are exercised
        bn = _fold_bn(jax.random.uniform(ks[4], (O,)) + 0.5,
                      jax.random.normal(ks[5], (O,)) * 0.1,
                      jax.random.normal(ks[6], (O,)) * 0.1,
                      jax.random.uniform(ks[7], (O,)) + 0.5)
        bnr = _fold_bn(jax.random.uniform(ks[8], (O,)) + 0.5,
                       jax.random.normal(ks[9], (O,)) * 0.1,
                       jax.random.normal(ks[10], (O,)) * 0.1,
                       jax.random.uniform(ks[11], (O,)) + 0.5)
    else:           # exact init_weights() state: main gamma=1e-6, residual gamma=1
        bn = _fold_bn(jnp.full((O,), 1e-6), jnp.zeros((O,)),
                      jnp.zeros((O,)), jnp.ones((O,)))
        bnr = _fold_bn(jnp.ones((O,)), jnp.zeros((O,)),
                       jnp.zeros((O,)), jnp.ones((O,)))
    return (x, W, b, A_eff) + bn + (Wr, br) + bnr


if __name__ == "__main__":
    key = jax.random.PRNGKey(0)
    #          N  C   O  T    V   trained_bn
    cases = [(2, 4,  8, 16,  16, False),   # init_weights() BN state
             (2, 4,  8, 16,  16, True),    # vertex-first path (C < O)
             (2, 32, 8, 16,  16, True),    # channel-first path (C > O)
             (2, 4,  8, 8,   20, True),    # V=20 -> zero-padded vertices (real-graph path)
             (2, 4,  8, 128, 16, True)]    # multi-chunk slab, larger grid
    for idx, (N, C, O, T, V, trained) in enumerate(cases):
        key, sub = jax.random.split(key)
        args = _make_case(sub, N, C, O, T, V, trained_bn=trained)
        ref = reference(*args)
        # f32 = exact semantics (tight tol); bf16 = perf mode (MXU-operand quantisation).
        for dtype, tol in ((jnp.float32, 1e-4), (jnp.bfloat16, 5e-2)):
            out = jax.block_until_ready(graph_convolution(*args, compute_dtype=dtype))
            assert out.shape == (N, O, T, V), (out.shape, (N, O, T, V))
            err = float(jnp.max(jnp.abs(out - ref)))
            assert jnp.allclose(out, ref, atol=tol, rtol=tol), (
                f"case {idx} ({dtype.__name__}): max abs err {err}")
    print("KERNEL_OK")
</pallas_src>

<mosaic_0001>
module attributes {stable_mosaic.version = 11 : i64} {
  func.func @_gcn_kernel(%arg0: i32, %arg1: i32, %arg2: memref<1x4x256xf32, #tpu.memory_space<vmem>>, %arg3: memref<4x8x4xf32, #tpu.memory_space<vmem>>, %arg4: memref<3x256x256xf32, #tpu.memory_space<vmem>>, %arg5: memref<8x1xf32, #tpu.memory_space<vmem>>, %arg6: memref<1x8x256xf32, #tpu.memory_space<vmem>>) attributes {dimension_semantics = [#tpu.dimension_semantics<parallel>, #tpu.dimension_semantics<parallel>], iteration_bounds = array<i64: 2, 1>, scalar_prefetch = 0 : i64, scratch_operands = 0 : i64, tpu.core_type = #tpu.core_type<tc>, window_params = [{transform_indices = @transform_0, window_bounds = array<i64: 1, 4, 256>}, {pipeline_mode = #tpu.pipeline_mode<synchronous>, transform_indices = @transform_1, window_bounds = array<i64: 4, 8, 4>}, {pipeline_mode = #tpu.pipeline_mode<synchronous>, transform_indices = @transform_2, window_bounds = array<i64: 3, 256, 256>}, {pipeline_mode = #tpu.pipeline_mode<synchronous>, transform_indices = @transform_3, window_bounds = array<i64: 8, 1>}, {transform_indices = @transform_4, window_bounds = array<i64: 1, 8, 256>}]} {
    %c0 = arith.constant 0 : index
    %c0_0 = arith.constant 0 : index
    %0 = vector.load %arg5[%c0, %c0_0] : memref<8x1xf32, #tpu.memory_space<vmem>>, vector<8x1xf32>
    %1 = vector.shape_cast %0 : vector<8x1xf32> to vector<8x1xf32>
    %2 = vector.broadcast %1 : vector<8x1xf32> to vector<8x256xf32>
    %c0_1 = arith.constant 0 : index
    %c0_2 = arith.constant 0 : index
    %c0_3 = arith.constant 0 : index
    %3 = vector.load %arg2[%c0_1, %c0_2, %c0_3] : memref<1x4x256xf32, #tpu.memory_space<vmem>>, vector<1x4x256xf32>
    %4 = vector.shape_cast %3 : vector<1x4x256xf32> to vector<4x256xf32>
    %c3 = arith.constant 3 : index
    %c0_4 = arith.constant 0 : index
    %c0_5 = arith.constant 0 : index
    %5 = vector.load %arg3[%c3, %c0_4, %c0_5] : memref<4x8x4xf32, #tpu.memory_space<vmem>>, vector<1x8x4xf32>
    %6 = vector.shape_cast %5 : vector<1x8x4xf32> to vector<8x4xf32>
    %cst = arith.constant dense<0.000000e+00> : vector<8x256xf32>
    %7 = tpu.matmul %6, %4, %cst {dimension_numbers = #tpu.dot_dimension_numbers<[1], [0], [0], [1], [0, 0, 1, 1], [], []>} : vector<8x4xf32>, vector<4x256xf32>, vector<8x256xf32> -> vector<8x256xf32>
    %c0_6 = arith.constant 0 : index
    %c0_7 = arith.constant 0 : index
    %c0_8 = arith.constant 0 : index
    %8 = vector.load %arg4[%c0_6, %c0_7, %c0_8] : memref<3x256x256xf32, #tpu.memory_space<vmem>>, vector<1x256x256xf32>
    %9 = vector.shape_cast %8 : vector<1x256x256xf32> to vector<256x256xf32>
    %cst_9 = arith.constant dense<0.000000e+00> : vector<4x256xf32>
    %10 = tpu.matmul %4, %9, %cst_9 {dimension_numbers = #tpu.dot_dimension_numbers<[1], [0], [0], [1], [0, 0, 1, 1], [], []>} : vector<4x256xf32>, vector<256x256xf32>, vector<4x256xf32> -> vector<4x256xf32>
    %c0_10 = arith.constant 0 : index
    %c0_11 = arith.constant 0 : index
    %c0_12 = arith.constant 0 : index
    %11 = vector.load %arg3[%c0_10, %c0_11, %c0_12] : memref<4x8x4xf32, #tpu.memory_space<vmem>>, vector<1x8x4xf32>
    %12 = vector.shape_cast %11 : vector<1x8x4xf32> to vector<8x4xf32>
    %cst_13 = arith.constant dense<0.000000e+00> : vector<8x256xf32>
    %13 = tpu.matmul %12, %10, %cst_13 {dimension_numbers = #tpu.dot_dimension_numbers<[1], [0], [0], [1], [0, 0, 1, 1], [], []>} : vector<8x4xf32>, vector<4x256xf32>, vector<8x256xf32> -> vector<8x256xf32>
    %14 = arith.addf %7, %13 : vector<8x256xf32>
    %c1 = arith.constant 1 : index
    %c0_14 = arith.constant 0 : index
    %c0_15 = arith.constant 0 : index
    %15 = vector.load %arg4[%c1, %c0_14, %c0_15] : memref<3x256x256xf32, #tpu.memory_space<vmem>>, vector<1x256x256xf32>
    %16 = vector.shape_cast %15 : vector<1x256x256xf32> to vector<256x256xf32>
    %cst_16 = arith.constant dense<0.000000e+00> : vector<4x256xf32>
    %17 = tpu.matmul %4, %16, %cst_16 {dimension_numbers = #tpu.dot_dimension_numbers<[1], [0], [0], [1], [0, 0, 1, 1], [], []>} : vector<4x256xf32>, vector<256x256xf32>, vector<4x256xf32> -> vector<4x256xf32>
    %c1_17 = arith.constant 1 : index
    %c0_18 = arith.constant 0 : index
    %c0_19 = arith.constant 0 : index
    %18 = vector.load %arg3[%c1_17, %c0_18, %c0_19] : memref<4x8x4xf32, #tpu.memory_space<vmem>>, vector<1x8x4xf32>
    %19 = vector.shape_cast %18 : vector<1x8x4xf32> to vector<8x4xf32>
    %cst_20 = arith.constant dense<0.000000e+00> : vector<8x256xf32>
    %20 = tpu.matmul %19, %17, %cst_20 {dimension_numbers = #tpu.dot_dimension_numbers<[1], [0], [0], [1], [0, 0, 1, 1], [], []>} : vector<8x4xf32>, vector<4x256xf32>, vector<8x256xf32> -> vector<8x256xf32>
    %21 = arith.addf %14, %20 : vector<8x256xf32>
    %c2 = arith.constant 2 : index
    %c0_21 = arith.constant 0 : index
    %c0_22 = arith.constant 0 : index
    %22 = vector.load %arg4[%c2, %c0_21, %c0_22] : memref<3x256x256xf32, #tpu.memory_space<vmem>>, vector<1x256x256xf32>
    %23 = vector.shape_cast %22 : vector<1x256x256xf32> to vector<256x256xf32>
    %cst_23 = arith.constant dense<0.000000e+00> : vector<4x256xf32>
    %24 = tpu.matmul %4, %23, %cst_23 {dimension_numbers = #tpu.dot_dimension_numbers<[1], [0], [0], [1], [0, 0, 1, 1], [], []>} : vector<4x256xf32>, vector<256x256xf32>, vector<4x256xf32> -> vector<4x256xf32>
    %c2_24 = arith.constant 2 : index
    %c0_25 = arith.constant 0 : index
    %c0_26 = arith.constant 0 : index
    %25 = vector.load %arg3[%c2_24, %c0_25, %c0_26] : memref<4x8x4xf32, #tpu.memory_space<vmem>>, vector<1x8x4xf32>
    %26 = vector.shape_cast %25 : vector<1x8x4xf32> to vector<8x4xf32>
    %cst_27 = arith.constant dense<0.000000e+00> : vector<8x256xf32>
    %27 = tpu.matmul %26, %24, %cst_27 {dimension_numbers = #tpu.dot_dimension_numbers<[1], [0], [0], [1], [0, 0, 1, 1], [], []>} : vector<8x4xf32>, vector<4x256xf32>, vector<8x256xf32> -> vector<8x256xf32>
    %28 = arith.addf %21, %27 : vector<8x256xf32>
    %29 = arith.addf %28, %2 : vector<8x256xf32>
    %cst_28 = arith.constant 0.000000e+00 : f32
    %30 = vector.broadcast %cst_28 : f32 to vector<8x256xf32>
    %31 = arith.maximumf %29, %30 : vector<8x256xf32>
    %c0_29 = arith.constant 0 : index
    %c0_30 = arith.constant 0 : index
    %c0_31 = arith.constant 0 : index
    %32 = vector.load %arg6[%c0_29, %c0_30, %c0_31] : memref<1x8x256xf32, #tpu.memory_space<vmem>>, vector<1x8x256xf32>
    %33 = vector.shape_cast %32 : vector<1x8x256xf32> to vector<8x256xf32>
    %34 = vector.shape_cast %31 : vector<8x256xf32> to vector<1x8x256xf32>
    tpu.vector_store %arg6[%c0_29, %c0_30, %c0_31], %34 {strides = array<i32>} : memref<1x8x256xf32, #tpu.memory_space<vmem>>, vector<1x8x256xf32>,
    return
  }
  func.func @transform_0(%arg0: i32, %arg1: i32) -> (i32, i32, i32) {
    %c0_i32 = arith.constant 0 : i32
    %c0_i32_0 = arith.constant 0 : i32
    return %arg0, %c0_i32, %arg1 : i32, i32, i32
  }
  func.func @transform_1(%arg0: i32, %arg1: i32) -> (i32, i32, i32) {
    %c0_i32 = arith.constant 0 : i32
    %c0_i32_0 = arith.constant 0 : i32
    %c0_i32_1 = arith.constant 0 : i32
    %c0_i32_2 = arith.constant 0 : i32
    return %c0_i32, %c0_i32_0, %c0_i32_1 : i32, i32, i32
  }
  func.func @transform_2(%arg0: i32, %arg1: i32) -> (i32, i32, i32) {
    %c0_i32 = arith.constant 0 : i32
    %c0_i32_0 = arith.constant 0 : i32
    %c0_i32_1 = arith.constant 0 : i32
    %c0_i32_2 = arith.constant 0 : i32
    return %c0_i32, %c0_i32_0, %c0_i32_1 : i32, i32, i32
  }
  func.func @transform_3(%arg0: i32, %arg1: i32) -> (i32, i32) {
    %c0_i32 = arith.constant 0 : i32
    %c0_i32_0 = arith.constant 0 : i32
    %c0_i32_1 = arith.constant 0 : i32
    return %c0_i32, %c0_i32_0 : i32, i32
  }
  func.func @transform_4(%arg0: i32, %arg1: i32) -> (i32, i32, i32) {
    %c0_i32 = arith.constant 0 : i32
    %c0_i32_0 = arith.constant 0 : i32
    return %arg0, %c0_i32, %arg1 : i32, i32, i32
  }
}

</mosaic_0001>

<llo_original>
// kernel: tpu_custom_call.1
$region0: #{tpu_custom_call.1}
  #allocation0 [shape = 'u32[]', space=smem, size = 0x4, offset = 0x4, fixed_abs, tag = 'smem constant byte address 0x4 - core index']
  #allocation1 [shape = 'u32[144,128]{1,0:T(1,128)}', space=vmem, size = 0x12000, scoped, tag = 'internal scratch']
  %s0 = inlined_call_operand.vmem [shape: f32[2,4,256], index: 0, kind: input, shape index: {}]
  %s1 = inlined_call_operand.vmem [shape: f32[4,8,4], index: 1, kind: input, shape index: {}]
  %s2 = inlined_call_operand.hbm [shape: f32[3,256,256], index: 2, kind: input, shape index: {}]
  %s3 = inlined_call_operand.vmem [shape: f32[8,1], index: 3, kind: input, shape index: {}]
  %s4 = inlined_call_operand.hbm [shape: f32[2,8,256], index: 4, kind: output, shape index: {}]
  %s5 = sld [smem:[#allocation0]]
  $region53: #{tpu_custom_call.1} parent=0
    _
  %s7 = ssub.s32 1, %s5
  %s8 = scalar_select 0, %s7, %s5
  $region1: #{tpu_custom_call.1} parent=0
    #allocation2 [shape = 'u8[786432]{0}', space=vmem, size = 0xc0000, scoped, tag = 'input window, operand 2, single buffered']
    #allocation3 [shape = 's32[2]{0}', space=sflag, size = 0x8, scoped, tag = 'scoped memory for tpu_custom_call.1']
    #allocation4 [shape = 's32[2]{0}', space=sflag, size = 0x8, scoped, tag = 'scoped memory for tpu_custom_call.1']
    #allocation5 [shape = 'u8[16384]{0}', space=vmem, size = 0x4000, scoped, tag = 'output window, operand 0']
    %9 = vsyncpa [#allocation3], 0
    %10 = vsyncpa [#allocation4], 0
    %s11 = scalar_lea.sflag [#allocation4], 1
    %12 = vsyncpa %s11, 0
    loop: start=0, step=1, limit=4
    $region2: #{tpu_custom_call.1} parent=1 // loop_pre_header
      _
    $region3: #{tpu_custom_call.1} parent=1 // loop_header
      %s14 = sphi 0, %s18
      %p15 = scmp.ge.s32.totalorder %s14, 4
      %s21 = sphi 0, %s33
      %s22 = sphi 0, %s29
      %s23 = sphi 0, %s21
      %s24 = sphi 0, %s22
      %s25 = sphi 0, %s23
      %s26 = sphi 0, %s24
      %s38 = sphi 0, %s40
      %s41 = sphi 0, %s38
      %s42 = sphi 0, %s41
      %s58 = sphi 0, %s42
      %s62 = sphi 0, %s62
      %s64 = sphi 0, %s62
      %s65 = sphi 0, %s64
      %s79 = sphi 0, %s65
      %s83 = sphi 0, %s83
      %s85 = sphi 0, %s83
      %s86 = sphi 0, %s85
      %s100 = sphi 0, %s86
      %s104 = sphi 0, %s104
      %s106 = sphi 0, %s104
      %s107 = sphi 0, %s106
      %s121 = sphi 0, %s107
      %s129 = sphi 0, %s131
      %s132 = sphi 0, %s129
      %s133 = sphi 0, %s132
      %s149 = sphi 0, %s133
    $region4: #{tpu_custom_call.1} parent=1 // loop_header_branch
      %17 = sbr.rel (%p15) target = $region8
    $region5: #{tpu_custom_call.1} parent=1 // loop_body
      %s19 = ssub.s32 %s14, 1
      %s20 = ssub.s32 %s14, 2
      %s27 = sadd.s32 1, %s22
      %p28 = scmp.ge.s32.totalorder %s27, 1
      %s29 = scalar_select %p28, 0, %s27
      %s30 = sadd.s32 1, %s21
      %s31 = scalar_select %p28, %s30, %s21
      %p32 = scmp.ge.s32.totalorder %s31, 2
      %s33 = scalar_select %p32, 0, %s31
      %s34 = ssub.s32 %s21, %s33
      %s35 = ssub.s32 %s22, %s29
      %s36 = sor.u32 %s34, %s35
      %p37 = scmp.eq.s32.totalorder %s36, 0
      %s39 = sadd.s32 %s38, 1
      %s40 = scalar_select %p37, %s38, %s39
      %p43 = pneg %p37
      %p44 = scmp.eq.s32.totalorder %s14, 1
      %p45 = por %p43, %p44
      %p46 = scmp.ne.s32.totalorder %s38, %s41
      %p47 = scmp.eq.s32.totalorder %s14, 0
      %p48 = por %p46, %p47
      %p49 = scmp.ne.s32.totalorder %s38, %s41
      %p50 = scmp.eq.s32.totalorder %s19, 1
      %p51 = por %p49, %p50
      %p52 = scmp.ne.s32.totalorder %s41, %s42
      %p53 = scmp.eq.s32.totalorder %s19, 0
      %p54 = por %p52, %p53
      %p55 = scmp.ne.s32.totalorder %s41, %s42
      %p56 = scmp.eq.s32.totalorder %s20, 1
      %p57 = por %p55, %p56
      %p59 = scmp.ne.s32.totalorder %s42, %s58
      %p60 = scmp.eq.s32.totalorder %s20, 0
      %p61 = por %p59, %p60
      %s63 = sadd.s32 %s62, 1
      %p66 = scmp.eq.s32.totalorder %s14, 1
      %p67 = scmp.ne.s32.totalorder %s62, %s64
      %p68 = scmp.eq.s32.totalorder %s14, 0
      %p69 = por %p67, %p68
      %p70 = scmp.ne.s32.totalorder %s62, %s64
      %p71 = scmp.eq.s32.totalorder %s19, 1
      %p72 = por %p70, %p71
      %p73 = scmp.ne.s32.totalorder %s64, %s65
      %p74 = scmp.eq.s32.totalorder %s19, 0
      %p75 = por %p73, %p74
      %p76 = scmp.ne.s32.totalorder %s64, %s65
      %p77 = scmp.eq.s32.totalorder %s20, 1
      %p78 = por %p76, %p77
      %p80 = scmp.ne.s32.totalorder %s65, %s79
      %p81 = scmp.eq.s32.totalorder %s20, 0
      %p82 = por %p80, %p81
      %s84 = sadd.s32 %s83, 1
      %p87 = scmp.eq.s32.totalorder %s14, 1
      %p88 = scmp.ne.s32.totalorder %s83, %s85
      %p89 = scmp.eq.s32.totalorder %s14, 0
      %p90 = por %p88, %p89
      %p91 = scmp.ne.s32.totalorder %s83, %s85
      %p92 = scmp.eq.s32.totalorder %s19, 1
      %p93 = por %p91, %p92
      %p94 = scmp.ne.s32.totalorder %s85, %s86
      %p95 = scmp.eq.s32.totalorder %s19, 0
      %p96 = por %p94, %p95
      %p97 = scmp.ne.s32.totalorder %s85, %s86
      %p98 = scmp.eq.s32.totalorder %s20, 1
      %p99 = por %p97, %p98
      %p101 = scmp.ne.s32.totalorder %s86, %s100
      %p102 = scmp.eq.s32.totalorder %s20, 0
      %p103 = por %p101, %p102
      %s105 = sadd.s32 %s104, 1
      %p108 = scmp.eq.s32.totalorder %s14, 1
      %p109 = scmp.ne.s32.totalorder %s104, %s106
      %p110 = scmp.eq.s32.totalorder %s14, 0
      %p111 = por %p109, %p110
      %p112 = scmp.ne.s32.totalorder %s104, %s106
      %p113 = scmp.eq.s32.totalorder %s19, 1
      %p114 = por %p112, %p113
      %p115 = scmp.ne.s32.totalorder %s106, %s107
      %p116 = scmp.eq.s32.totalorder %s19, 0
      %p117 = por %p115, %p116
      %p118 = scmp.ne.s32.totalorder %s106, %s107
      %p119 = scmp.eq.s32.totalorder %s20, 1
      %p120 = por %p118, %p119
      %p122 = scmp.ne.s32.totalorder %s107, %s121
      %p123 = scmp.eq.s32.totalorder %s20, 0
      %p124 = por %p122, %p123
      %s125 = ssub.s32 %s21, %s33
      %s126 = ssub.s32 %s22, %s29
      %s127 = sor.u32 %s125, %s126
      %p128 = scmp.eq.s32.totalorder %s127, 0
      %s130 = sadd.s32 %s129, 1
      %s131 = scalar_select %p128, %s129, %s130
      %p134 = pneg %p128
      %p135 = scmp.eq.s32.totalorder %s14, 1
      %p136 = por %p134, %p135
      %p137 = scmp.ne.s32.totalorder %s129, %s132
      %p138 = scmp.eq.s32.totalorder %s14, 0
      %p139 = por %p137, %p138
      %p140 = scmp.ne.s32.totalorder %s129, %s132
      %p141 = scmp.eq.s32.totalorder %s19, 1
      %p142 = por %p140, %p141
      %p143 = scmp.ne.s32.totalorder %s132, %s133
      %p144 = scmp.eq.s32.totalorder %s19, 0
      %p145 = por %p143, %p144
      %p146 = scmp.ne.s32.totalorder %s132, %s133
      %p147 = scmp.eq.s32.totalorder %s20, 1
      %p148 = por %p146, %p147
      %p150 = scmp.ne.s32.totalorder %s133, %s149
      %p151 = scmp.eq.s32.totalorder %s20, 0
      %p152 = por %p150, %p151
      %p153 = scmp.le.s32.totalorder 1, %s14
      %p154 = scmp.lt.s32.totalorder %s14, 3
      %p155 = pnand %p153, %p154
      %p156 = pneg %p155
      // Predicated region
      $region9: #{tpu_custom_call.1} parent=5 // pred_check
        _
      $region10: #{tpu_custom_call.1} parent=5 // pred_check_branch
        %158 = sbr.rel (%p155) target = $region12
      $region11: #{tpu_custom_call.1} parent=5 // pred_region
        %s159 = ssub.s32 %s14, 1
        // Predicated region
        $region13: #{tpu_custom_call.1} parent=11 // pred_check
          %p160 = pneg %p75
        $region14: #{tpu_custom_call.1} parent=11 // pred_check_branch
          %162 = sbr.rel (%p160) target = $region16
        $region15: #{tpu_custom_call.1} parent=11 // pred_region
          _
        $region16: #{tpu_custom_call.1} parent=11 // pred_fallthru
          _
        // Predicated region
        $region17: #{tpu_custom_call.1} parent=11 // pred_check
          %p163 = pneg %p96
        $region18: #{tpu_custom_call.1} parent=11 // pred_check_branch
          %165 = sbr.rel (%p163) target = $region20
        $region19: #{tpu_custom_call.1} parent=11 // pred_region
          %s167 = ssub.s32 24576, 24576
          %168 = vsyncadd [#allocation3], %s167
          %s169 = sshll.u32 [#allocation2], 4
          %s170 = int_to_ptr.vmem [resolvable:$true] %s169
          %175 = dma.hbm_to_vmem [thread:$0]  %s2, 24576, %s170, [#allocation3], 256, 256, 16
        $region20: #{tpu_custom_call.1} parent=11 // pred_fallthru
          _
        // Predicated region
        $region21: #{tpu_custom_call.1} parent=11 // pred_check
          %p176 = pneg %p117
        $region22: #{tpu_custom_call.1} parent=11 // pred_check_branch
          %178 = sbr.rel (%p176) target = $region24
        $region23: #{tpu_custom_call.1} parent=11 // pred_region
          _
        $region24: #{tpu_custom_call.1} parent=11 // pred_fallthru
          _
      $region12: #{tpu_custom_call.1} parent=5 // pred_fallthru
        _
      %p179 = scmp.lt.s32.totalorder %s14, 2
      // Predicated region
      $region25: #{tpu_custom_call.1} parent=5 // pred_check
        %p180 = pneg %p179
      $region26: #{tpu_custom_call.1} parent=5 // pred_check_branch
        %182 = sbr.rel (%p180) target = $region28
      $region27: #{tpu_custom_call.1} parent=5 // pred_region
        // Predicated region
        $region29: #{tpu_custom_call.1} parent=27 // pred_check
          %p183 = pneg %p48
        $region30: #{tpu_custom_call.1} parent=27 // pred_check_branch
          %185 = sbr.rel (%p183) target = $region32
        $region31: #{tpu_custom_call.1} parent=27 // pred_region
          %s186 = smul.u32 2, %s22
          %p187 = scmp.lt.s32.totalorder %s21, 1
          %s188 = scalar_select %p187, %s21, 1
          %p189 = scmp.lt.s32.totalorder %s186, 1
          %s190 = scalar_select %p189, %s186, 1
          %s191 = smul.addr %s188, 2
          %s192 = sadd.s32 %s190, %s191
          %s193 = smul.addr %s192, 4
          %s194 = scalar_lea.vmem %s0, %s193
          %s195 = smul.u32 2, %s22
        $region32: #{tpu_custom_call.1} parent=27 // pred_fallthru
          _
      $region28: #{tpu_custom_call.1} parent=5 // pred_fallthru
        _
      %p196 = scmp.le.s32.totalorder 1, %s14
      %p197 = scmp.lt.s32.totalorder %s14, 3
      %p198 = pnand %p196, %p197
      %p199 = pneg %p198
      // Predicated region
      $region33: #{tpu_custom_call.1} parent=5 // pred_check
        _
      $region34: #{tpu_custom_call.1} parent=5 // pred_check_branch
        %201 = sbr.rel (%p198) target = $region36
      $region35: #{tpu_custom_call.1} parent=5 // pred_region
        %s202 = ssub.s32 %s14, 1
        // Predicated region
        $region37: #{tpu_custom_call.1} parent=35 // pred_check
          %p203 = pneg %p96
        $region38: #{tpu_custom_call.1} parent=35 // pred_check_branch
          %205 = sbr.rel (%p203) target = $region40
        $region39: #{tpu_custom_call.1} parent=35 // pred_region
          %206 = dma.done [#allocation3], 24576
        $region40: #{tpu_custom_call.1} parent=35 // pred_fallthru
          _
        %s207 = smul.u32 2, %s24
        %p208 = scmp.lt.s32.totalorder %s23, 1
        %s209 = scalar_select %p208, %s23, 1
        %p210 = scmp.lt.s32.totalorder %s207, 1
        %s211 = scalar_select %p210, %s207, 1
        %s212 = smul.addr %s209, 2
        %s213 = sadd.s32 %s211, %s212
        %s214 = smul.addr %s213, 4
        %s215 = scalar_lea.vmem %s0, %s214
        %p216 = pneg %p54
        %p217 = pneg %p51
        %p218 = pneg %p75
        %p219 = pneg %p72
        %p220 = pneg %p96
        %p221 = pneg %p93
        %p222 = pneg %p117
        %p223 = pneg %p114
        %p224 = pneg %p145
        %p225 = pneg %p142
        %s226 = sand.u32 %s132, 1
        %s227 = scalar_lea.sflag [#allocation4], %s226
        %s228 = sand.u32 %s132, 1
        %s229 = smul.addr %s228, 16
        %s230 = scalar_lea.vmem [#allocation5], %s229
        %s231 = smul.u32 2, %s24
        %p232 = scmp.lt.s32.totalorder %s23, 1
        %s233 = scalar_select %p232, %s23, 1
        %p234 = scmp.lt.s32.totalorder %s231, 1
        %s235 = scalar_select %p234, %s231, 1
        %s236 = smul.addr %s233, 2
        %s237 = sadd.s32 %s235, %s236
        %s238 = smul.addr %s237, 4
        %s239 = scalar_lea.vmem %s0, %s238
        %s240 = smul.u32 2, %s24
        %s241 = smul.u32 2, %s24
        %v242 = vld [vmem:[%s3] sm:$0xff]
        %244 = vset.pattern.permute.xlu0 0
        %245 = vperm.xlu0 %244, %v242
        %v246 = vpop.permute.xlu0 %245
        %v248 = vld [vmem:[%s239] sm:$0xff]
        %s249 = scalar_lea.vmem %s1, 24
        %v250 = vld [vmem:[%s249] sm:$0xff]
        %v251 = vld [vmem:[#allocation2] sm:$0xff]
        %v252 = vld [vmem:[#allocation2 + $0x8] sm:$0xff]
        %v253 = vld [vmem:[#allocation2 + $0x10] sm:$0xff]
        %v254 = vld [vmem:[#allocation2 + $0x18] sm:$0xff]
        %v255 = vld [vmem:[#allocation2 + $0x20] sm:$0xff]
        %v256 = vld [vmem:[#allocation2 + $0x28] sm:$0xff]
        %v257 = vld [vmem:[#allocation2 + $0x30] sm:$0xff]
        %v258 = vld [vmem:[#allocation2 + $0x38] sm:$0xff]
        %v259 = vld [vmem:[#allocation2 + $0x40] sm:$0xff]
        %v260 = vld [vmem:[#allocation2 + $0x48] sm:$0xff]
        %v261 = vld [vmem:[#allocation2 + $0x50] sm:$0xff]
        %v262 = vld [vmem:[#allocation2 + $0x58] sm:$0xff]
        %v263 = vld [vmem:[#allocation2 + $0x60] sm:$0xff]
        %v264 = vld [vmem:[#allocation2 + $0x68] sm:$0xff]
        %v265 = vld [vmem:[#allocation2 + $0x70] sm:$0xff]
        %v266 = vld [vmem:[#allocation2 + $0x78] sm:$0xff]
        %v267 = vld [vmem:[#allocation2 + $0x80] sm:$0xff]
        %v268 = vld [vmem:[#allocation2 + $0x88] sm:$0xff]
        %v269 = vld [vmem:[#allocation2 + $0x90] sm:$0xff]
        %v270 = vld [vmem:[#allocation2 + $0x98] sm:$0xff]
        %v271 = vld [vmem:[#allocation2 + $0xa0] sm:$0xff]
        %v272 = vld [vmem:[#allocation2 + $0xa8] sm:$0xff]
        %v273 = vld [vmem:[#allocation2 + $0xb0] sm:$0xff]
        %v274 = vld [vmem:[#allocation2 + $0xb8] sm:$0xff]
        %v275 = vld [vmem:[#allocation2 + $0xc0] sm:$0xff]
        %v276 = vld [vmem:[#allocation2 + $0xc8] sm:$0xff]
        %v277 = vld [vmem:[#allocation2 + $0xd0] sm:$0xff]
        %v278 = vld [vmem:[#allocation2 + $0xd8] sm:$0xff]
        %v279 = vld [vmem:[#allocation2 + $0xe0] sm:$0xff]
        %v280 = vld [vmem:[#allocation2 + $0xe8] sm:$0xff]
        %v281 = vld [vmem:[#allocation2 + $0xf0] sm:$0xff]
        %v282 = vld [vmem:[#allocation2 + $0xf8] sm:$0xff]
        %v283 = vld [vmem:[#allocation2 + $0x100] sm:$0xff]
        %v284 = vld [vmem:[#allocation2 + $0x108] sm:$0xff]
        %v285 = vld [vmem:[#allocation2 + $0x110] sm:$0xff]
        %v286 = vld [vmem:[#allocation2 + $0x118] sm:$0xff]
        %v287 = vld [vmem:[#allocation2 + $0x120] sm:$0xff]
        %v288 = vld [vmem:[#allocation2 + $0x128] sm:$0xff]
        %v289 = vld [vmem:[#allocation2 + $0x130] sm:$0xff]
        %v290 = vld [vmem:[#allocation2 + $0x138] sm:$0xff]
        %v291 = vld [vmem:[#allocation2 + $0x140] sm:$0xff]
        %v292 = vld [vmem:[#allocation2 + $0x148] sm:$0xff]
        %v293 = vld [vmem:[#allocation2 + $0x150] sm:$0xff]
        %v294 = vld [vmem:[#allocation2 + $0x158] sm:$0xff]
        %v295 = vld [vmem:[#allocation2 + $0x160] sm:$0xff]
        %v296 = vld [vmem:[#allocation2 + $0x168] sm:$0xff]
        %v297 = vld [vmem:[#allocation2 + $0x170] sm:$0xff]
        %v298 = vld [vmem:[#allocation2 + $0x178] sm:$0xff]
        %v299 = vld [vmem:[#allocation2 + $0x180] sm:$0xff]
        %v300 = vld [vmem:[#allocation2 + $0x188] sm:$0xff]
        %v301 = vld [vmem:[#allocation2 + $0x190] sm:$0xff]
        %v302 = vld [vmem:[#allocation2 + $0x198] sm:$0xff]
        %v303 = vld [vmem:[#allocation2 + $0x1a0] sm:$0xff]
        %v304 = vld [vmem:[#allocation2 + $0x1a8] sm:$0xff]
        %v305 = vld [vmem:[#allocation2 + $0x1b0] sm:$0xff]
        %v306 = vld [vmem:[#allocation2 + $0x1b8] sm:$0xff]
        %v307 = vld [vmem:[#allocation2 + $0x1c0] sm:$0xff]
        %v308 = vld [vmem:[#allocation2 + $0x1c8] sm:$0xff]
        %v309 = vld [vmem:[#allocation2 + $0x1d0] sm:$0xff]
        %v310 = vld [vmem:[#allocation2 + $0x1d8] sm:$0xff]
        %v311 = vld [vmem:[#allocation2 + $0x1e0] sm:$0xff]
        %v312 = vld [vmem:[#allocation2 + $0x1e8] sm:$0xff]
        %v313 = vld [vmem:[#allocation2 + $0x1f0] sm:$0xff]
        %v314 = vld [vmem:[#allocation2 + $0x1f8] sm:$0xff]
        %v316 = vcombine.high %v248, %v248
        %318 = vmatprep.subr.mxu0 %v282
        %319 = vmatpush1.msra.mxu0 %v281
        %320 = vmatprep.subr.mxu0 %v280
        %321 = vmatpush1.msra.mxu0 %v279
        %322 = vmatprep.subr.mxu0 %v278
        %323 = vmatpush1.msra.mxu0 %v277
        %324 = vmatprep.subr.mxu0 %v276
        %325 = vmatpush1.msra.mxu0 %v275
        %326 = vmatprep.subr.mxu0 %v274
        %327 = vmatpush1.msra.mxu0 %v273
        %328 = vmatprep.subr.mxu0 %v272
        %329 = vmatpush1.msra.mxu0 %v271
        %330 = vmatprep.subr.mxu0 %v270
        %331 = vmatpush1.msra.mxu0 %v269
        %332 = vmatprep.subr.mxu0 %v268
        %333 = vmatpush1.msra.mxu0 %v267
        %334 = vmatprep.subr.mxu0 %v266
        %335 = vmatpush1.msra.mxu0 %v265
        %336 = vmatprep.subr.mxu0 %v264
        %337 = vmatpush1.msra.mxu0 %v263
        %338 = vmatprep.subr.mxu0 %v262
        %339 = vmatpush1.msra.mxu0 %v261
        %340 = vmatprep.subr.mxu0 %v260
        %341 = vmatpush1.msra.mxu0 %v259
        %342 = vmatprep.subr.mxu0 %v258
        %343 = vmatpush1.msra.mxu0 %v257
        %344 = vmatprep.subr.mxu0 %v256
        %345 = vmatpush1.msra.mxu0 %v255
        %346 = vmatprep.subr.mxu0 %v254
        %347 = vmatpush1.msra.mxu0 %v253
        %348 = vmatprep.subr.mxu0 %v252
        %349 = vmatpush1.msra.mxu0 %v251
        %350 = vmatprep.subr.mxu0 %v314
        %351 = vmatpush2.msra.mxu0 %v313
        %352 = vmatprep.subr.mxu0 %v312
        %353 = vmatpush2.msra.mxu0 %v311
        %354 = vmatprep.subr.mxu0 %v310
        %355 = vmatpush2.msra.mxu0 %v309
        %356 = vmatprep.subr.mxu0 %v308
        %357 = vmatpush2.msra.mxu0 %v307
        %358 = vmatprep.subr.mxu0 %v306
        %359 = vmatpush2.msra.mxu0 %v305
        %360 = vmatprep.subr.mxu0 %v304
        %361 = vmatpush2.msra.mxu0 %v303
        %362 = vmatprep.subr.mxu0 %v302
        %363 = vmatpush2.msra.mxu0 %v301
        %364 = vmatprep.subr.mxu0 %v300
        %365 = vmatpush2.msra.mxu0 %v299
        %366 = vmatprep.subr.mxu0 %v298
        %367 = vmatpush2.msra.mxu0 %v297
        %368 = vmatprep.subr.mxu0 %v296
        %369 = vmatpush2.msra.mxu0 %v295
        %370 = vmatprep.subr.mxu0 %v294
        %371 = vmatpush2.msra.mxu0 %v293
        %372 = vmatprep.subr.mxu0 %v292
        %373 = vmatpush2.msra.mxu0 %v291
        %374 = vmatprep.subr.mxu0 %v290
        %375 = vmatpush2.msra.mxu0 %v289
        %376 = vmatprep.subr.mxu0 %v288
        %377 = vmatpush2.msra.mxu0 %v287
        %378 = vmatprep.subr.mxu0 %v286
        %379 = vmatpush2.msra.mxu0 %v285
        %380 = vmatprep.subr.mxu0 %v284
        %381 = vmatpush2.msra.mxu0 %v283
        %382 = vmatprep.mubr.f32.mxu0 %v316
        %383 = vmatmul.mubr.f32.gmra.mxu0 %v248
        %v384 = vpop.f32.mrf.mxu0
        %v385 = vadd.f32 0.0, %v384
        %v386 = vpop.f32.mrf.mxu0
        %v387 = vadd.f32 0.0, %v386
        %388 = vdwg.mxu0
        %v389 = vld [vmem:[%s1] sm:$0xff]
        %vm390 = vcmask 31744
        %v392 = vsel %vm390, %v389, 0
        %vm394 = vcmask 1043456
        %v396 = vsel %vm394, %v385, 0
        %v399 = vsel %vm394, %v387, 0
        %401 = vmatprep.subr.mxu0 0.0
        %402 = vmatpush1.msra.mxu0 0.0
        %403 = vmatprep.subr.mxu0 0.0
        %404 = vmatpush1.msra.mxu0 0.0
        %405 = vmatprep.subr.mxu0 0.0
        %406 = vmatpush1.msra.mxu0 0.0
        %407 = vmatprep.subr.mxu0 0.0
        %408 = vmatpush1.msra.mxu0 0.0
        %409 = vmatprep.subr.mxu0 0.0
        %410 = vmatpush1.msra.mxu0 0.0
        %411 = vmatprep.subr.mxu0 0.0
        %412 = vmatpush1.msra.mxu0 0.0
        %413 = vmatprep.subr.mxu0 0.0
        %414 = vmatpush1.msra.mxu0 0.0
        %415 = vmatprep.subr.mxu0 0.0
        %416 = vmatpush1.msra.mxu0 0.0
        %417 = vmatprep.subr.mxu0 0.0
        %418 = vmatpush1.msra.mxu0 0.0
        %419 = vmatprep.subr.mxu0 0.0
        %420 = vmatpush1.msra.mxu0 0.0
        %421 = vmatprep.subr.mxu0 0.0
        %422 = vmatpush1.msra.mxu0 0.0
        %423 = vmatprep.subr.mxu0 0.0
        %424 = vmatpush1.msra.mxu0 0.0
        %425 = vmatprep.subr.mxu0 0.0
        %426 = vmatpush1.msra.mxu0 0.0
        %427 = vmatprep.subr.mxu0 0.0
        %428 = vmatpush1.msra.mxu0 0.0
        %429 = vmatprep.subr.mxu0 0.0
        %430 = vmatpush1.msra.mxu0 0.0
        %431 = vmatprep.subr.mxu0 %v399
        %432 = vmatpush1.msra.mxu0 %v396
        %433 = vmatprep.subr.mxu0 0.0
        %434 = vmatpush2.msra.mxu0 0.0
        %435 = vmatprep.subr.mxu0 0.0
        %436 = vmatpush2.msra.mxu0 0.0
        %437 = vmatprep.subr.mxu0 0.0
        %438 = vmatpush2.msra.mxu0 0.0
        %439 = vmatprep.subr.mxu0 0.0
        %440 = vmatpush2.msra.mxu0 0.0
        %441 = vmatprep.subr.mxu0 0.0
        %442 = vmatpush2.msra.mxu0 0.0
        %443 = vmatprep.subr.mxu0 0.0
        %444 = vmatpush2.msra.mxu0 0.0
        %445 = vmatprep.subr.mxu0 0.0
        %446 = vmatpush2.msra.mxu0 0.0
        %447 = vmatprep.subr.mxu0 0.0
        %448 = vmatpush2.msra.mxu0 0.0
        %449 = vmatprep.subr.mxu0 0.0
        %450 = vmatpush2.msra.mxu0 0.0
        %451 = vmatprep.subr.mxu0 0.0
        %452 = vmatpush2.msra.mxu0 0.0
        %453 = vmatprep.subr.mxu0 0.0
        %454 = vmatpush2.msra.mxu0 0.0
        %455 = vmatprep.subr.mxu0 0.0
        %456 = vmatpush2.msra.mxu0 0.0
        %457 = vmatprep.subr.mxu0 0.0
        %458 = vmatpush2.msra.mxu0 0.0
        %459 = vmatprep.subr.mxu0 0.0
        %460 = vmatpush2.msra.mxu0 0.0
        %461 = vmatprep.subr.mxu0 0.0
        %462 = vmatpush2.msra.mxu0 0.0
        %463 = vmatprep.subr.mxu0 0.0
        %464 = vmatpush2.msra.mxu0 0.0
        %465 = vmatprep.mubr.f32.mxu0 0.0
        %466 = vmatmul.mubr.f32.gmra.mxu0 %v392
        %v467 = vpop.f32.mrf.mxu0
        %v468 = vadd.f32 0.0, %v467
        %v469 = vpop.f32.mrf.mxu0
        %v470 = vadd.f32 0.0, %v469
        %471 = vdwg.mxu0
        %v473 = vsel %vm390, %v250, 0
        %v475 = vsel %vm394, %v248, 0
        %v477 = vsel %vm394, %v316, 0
        %479 = vmatprep.subr.mxu0 0.0
        %480 = vmatpush1.msra.mxu0 0.0
        %481 = vmatprep.subr.mxu0 0.0
        %482 = vmatpush1.msra.mxu0 0.0
        %483 = vmatprep.subr.mxu0 0.0
        %484 = vmatpush1.msra.mxu0 0.0
        %485 = vmatprep.subr.mxu0 0.0
        %486 = vmatpush1.msra.mxu0 0.0
        %487 = vmatprep.subr.mxu0 0.0
        %488 = vmatpush1.msra.mxu0 0.0
        %489 = vmatprep.subr.mxu0 0.0
        %490 = vmatpush1.msra.mxu0 0.0
        %491 = vmatprep.subr.mxu0 0.0
        %492 = vmatpush1.msra.mxu0 0.0
        %493 = vmatprep.subr.mxu0 0.0
        %494 = vmatpush1.msra.mxu0 0.0
        %495 = vmatprep.subr.mxu0 0.0
        %496 = vmatpush1.msra.mxu0 0.0
        %497 = vmatprep.subr.mxu0 0.0
        %498 = vmatpush1.msra.mxu0 0.0
        %499 = vmatprep.subr.mxu0 0.0
        %500 = vmatpush1.msra.mxu0 0.0
        %501 = vmatprep.subr.mxu0 0.0
        %502 = vmatpush1.msra.mxu0 0.0
        %503 = vmatprep.subr.mxu0 0.0
        %504 = vmatpush1.msra.mxu0 0.0
        %505 = vmatprep.subr.mxu0 0.0
        %506 = vmatpush1.msra.mxu0 0.0
        %507 = vmatprep.subr.mxu0 0.0
        %508 = vmatpush1.msra.mxu0 0.0
        %509 = vmatprep.subr.mxu0 %v477
        %510 = vmatpush1.msra.mxu0 %v475
        %511 = vmatprep.subr.mxu0 0.0
        %512 = vmatpush2.msra.mxu0 0.0
        %513 = vmatprep.subr.mxu0 0.0
        %514 = vmatpush2.msra.mxu0 0.0
        %515 = vmatprep.subr.mxu0 0.0
        %516 = vmatpush2.msra.mxu0 0.0
        %517 = vmatprep.subr.mxu0 0.0
        %518 = vmatpush2.msra.mxu0 0.0
        %519 = vmatprep.subr.mxu0 0.0
        %520 = vmatpush2.msra.mxu0 0.0
        %521 = vmatprep.subr.mxu0 0.0
        %522 = vmatpush2.msra.mxu0 0.0
        %523 = vmatprep.subr.mxu0 0.0
        %524 = vmatpush2.msra.mxu0 0.0
        %525 = vmatprep.subr.mxu0 0.0
        %526 = vmatpush2.msra.mxu0 0.0
        %527 = vmatprep.subr.mxu0 0.0
        %528 = vmatpush2.msra.mxu0 0.0
        %529 = vmatprep.subr.mxu0 0.0
        %530 = vmatpush2.msra.mxu0 0.0
        %531 = vmatprep.subr.mxu0 0.0
        %532 = vmatpush2.msra.mxu0 0.0
        %533 = vmatprep.subr.mxu0 0.0
        %534 = vmatpush2.msra.mxu0 0.0
        %535 = vmatprep.subr.mxu0 0.0
        %536 = vmatpush2.msra.mxu0 0.0
        %537 = vmatprep.subr.mxu0 0.0
        %538 = vmatpush2.msra.mxu0 0.0
        %539 = vmatprep.subr.mxu0 0.0
        %540 = vmatpush2.msra.mxu0 0.0
        %541 = vmatprep.subr.mxu0 0.0
        %542 = vmatpush2.msra.mxu0 0.0
        %543 = vmatprep.mubr.f32.mxu0 0.0
        %544 = vmatmul.mubr.f32.gmra.mxu0 %v473
        %v545 = vpop.f32.mrf.mxu0
        %v546 = vadd.f32 %v468, %v545
        %v547 = vpop.f32.mrf.mxu0
        %v548 = vadd.f32 %v470, %v547
        %549 = vdwg.mxu0
        %s550 = scalar_lea.vmem [#allocation2], 512
        %v551 = vld [vmem:[%s550] sm:$0xff]
        %v552 = vld [vmem:[%s550 + $0x8] sm:$0xff]
        %v553 = vld [vmem:[%s550 + $0x10] sm:$0xff]
        %v554 = vld [vmem:[%s550 + $0x18] sm:$0xff]
        %v555 = vld [vmem:[%s550 + $0x20] sm:$0xff]
        %v556 = vld [vmem:[%s550 + $0x28] sm:$0xff]
        %v557 = vld [vmem:[%s550 + $0x30] sm:$0xff]
        %v558 = vld [vmem:[%s550 + $0x38] sm:$0xff]
        %v559 = vld [vmem:[%s550 + $0x40] sm:$0xff]
        %v560 = vld [vmem:[%s550 + $0x48] sm:$0xff]
        %v561 = vld [vmem:[%s550 + $0x50] sm:$0xff]
        %v562 = vld [vmem:[%s550 + $0x58] sm:$0xff]
        %v563 = vld [vmem:[%s550 + $0x60] sm:$0xff]
        %v564 = vld [vmem:[%s550 + $0x68] sm:$0xff]
        %v565 = vld [vmem:[%s550 + $0x70] sm:$0xff]
        %v566 = vld [vmem:[%s550 + $0x78] sm:$0xff]
        %v567 = vld [vmem:[%s550 + $0x80] sm:$0xff]
        %v568 = vld [vmem:[%s550 + $0x88] sm:$0xff]
        %v569 = vld [vmem:[%s550 + $0x90] sm:$0xff]
        %v570 = vld [vmem:[%s550 + $0x98] sm:$0xff]
        %v571 = vld [vmem:[%s550 + $0xa0] sm:$0xff]
        %v572 = vld [vmem:[%s550 + $0xa8] sm:$0xff]
        %v573 = vld [vmem:[%s550 + $0xb0] sm:$0xff]
        %v574 = vld [vmem:[%s550 + $0xb8] sm:$0xff]
        %v575 = vld [vmem:[%s550 + $0xc0] sm:$0xff]
        %v576 = vld [vmem:[%s550 + $0xc8] sm:$0xff]
        %v577 = vld [vmem:[%s550 + $0xd0] sm:$0xff]
        %v578 = vld [vmem:[%s550 + $0xd8] sm:$0xff]
        %v579 = vld [vmem:[%s550 + $0xe0] sm:$0xff]
        %v580 = vld [vmem:[%s550 + $0xe8] sm:$0xff]
        %v581 = vld [vmem:[%s550 + $0xf0] sm:$0xff]
        %v582 = vld [vmem:[%s550 + $0xf8] sm:$0xff]
        %v583 = vld [vmem:[%s550 + $0x100] sm:$0xff]
        %v584 = vld [vmem:[%s550 + $0x108] sm:$0xff]
        %v585 = vld [vmem:[%s550 + $0x110] sm:$0xff]
        %v586 = vld [vmem:[%s550 + $0x118] sm:$0xff]
        %v587 = vld [vmem:[%s550 + $0x120] sm:$0xff]
        %v588 = vld [vmem:[%s550 + $0x128] sm:$0xff]
        %v589 = vld [vmem:[%s550 + $0x130] sm:$0xff]
        %v590 = vld [vmem:[%s550 + $0x138] sm:$0xff]
        %v591 = vld [vmem:[%s550 + $0x140] sm:$0xff]
        %v592 = vld [vmem:[%s550 + $0x148] sm:$0xff]
        %v593 = vld [vmem:[%s550 + $0x150] sm:$0xff]
        %v594 = vld [vmem:[%s550 + $0x158] sm:$0xff]
        %v595 = vld [vmem:[%s550 + $0x160] sm:$0xff]
        %v596 = vld [vmem:[%s550 + $0x168] sm:$0xff]
        %v597 = vld [vmem:[%s550 + $0x170] sm:$0xff]
        %v598 = vld [vmem:[%s550 + $0x178] sm:$0xff]
        %v599 = vld [vmem:[%s550 + $0x180] sm:$0xff]
        %v600 = vld [vmem:[%s550 + $0x188] sm:$0xff]
        %v601 = vld [vmem:[%s550 + $0x190] sm:$0xff]
        %v602 = vld [vmem:[%s550 + $0x198] sm:$0xff]
        %v603 = vld [vmem:[%s550 + $0x1a0] sm:$0xff]
        %v604 = vld [vmem:[%s550 + $0x1a8] sm:$0xff]
        %v605 = vld [vmem:[%s550 + $0x1b0] sm:$0xff]
        %v606 = vld [vmem:[%s550 + $0x1b8] sm:$0xff]
        %v607 = vld [vmem:[%s550 + $0x1c0] sm:$0xff]
        %v608 = vld [vmem:[%s550 + $0x1c8] sm:$0xff]
        %v609 = vld [vmem:[%s550 + $0x1d0] sm:$0xff]
        %v610 = vld [vmem:[%s550 + $0x1d8] sm:$0xff]
        %v611 = vld [vmem:[%s550 + $0x1e0] sm:$0xff]
        %v612 = vld [vmem:[%s550 + $0x1e8] sm:$0xff]
        %v613 = vld [vmem:[%s550 + $0x1f0] sm:$0xff]
        %v614 = vld [vmem:[%s550 + $0x1f8] sm:$0xff]
        %615 = vmatprep.subr.mxu0 %v582
        %616 = vmatpush1.msra.mxu0 %v581
        %617 = vmatprep.subr.mxu0 %v580
        %618 = vmatpush1.msra.mxu0 %v579
        %619 = vmatprep.subr.mxu0 %v578
        %620 = vmatpush1.msra.mxu0 %v577
        %621 = vmatprep.subr.mxu0 %v576
        %622 = vmatpush1.msra.mxu0 %v575
        %623 = vmatprep.subr.mxu0 %v574
        %624 = vmatpush1.msra.mxu0 %v573
        %625 = vmatprep.subr.mxu0 %v572
        %626 = vmatpush1.msra.mxu0 %v571
        %627 = vmatprep.subr.mxu0 %v570
        %628 = vmatpush1.msra.mxu0 %v569
        %629 = vmatprep.subr.mxu0 %v568
        %630 = vmatpush1.msra.mxu0 %v567
        %631 = vmatprep.subr.mxu0 %v566
        %632 = vmatpush1.msra.mxu0 %v565
        %633 = vmatprep.subr.mxu0 %v564
        %634 = vmatpush1.msra.mxu0 %v563
        %635 = vmatprep.subr.mxu0 %v562
        %636 = vmatpush1.msra.mxu0 %v561
        %637 = vmatprep.subr.mxu0 %v560
        %638 = vmatpush1.msra.mxu0 %v559
        %639 = vmatprep.subr.mxu0 %v558
        %640 = vmatpush1.msra.mxu0 %v557
        %641 = vmatprep.subr.mxu0 %v556
        %642 = vmatpush1.msra.mxu0 %v555
        %643 = vmatprep.subr.mxu0 %v554
        %644 = vmatpush1.msra.mxu0 %v553
        %645 = vmatprep.subr.mxu0 %v552
        %646 = vmatpush1.msra.mxu0 %v551
        %647 = vmatprep.subr.mxu0 %v614
        %648 = vmatpush2.msra.mxu0 %v613
        %649 = vmatprep.subr.mxu0 %v612
        %650 = vmatpush2.msra.mxu0 %v611
        %651 = vmatprep.subr.mxu0 %v610
        %652 = vmatpush2.msra.mxu0 %v609
        %653 = vmatprep.subr.mxu0 %v608
        %654 = vmatpush2.msra.mxu0 %v607
        %655 = vmatprep.subr.mxu0 %v606
        %656 = vmatpush2.msra.mxu0 %v605
        %657 = vmatprep.subr.mxu0 %v604
        %658 = vmatpush2.msra.mxu0 %v603
        %659 = vmatprep.subr.mxu0 %v602
        %660 = vmatpush2.msra.mxu0 %v601
        %661 = vmatprep.subr.mxu0 %v600
        %662 = vmatpush2.msra.mxu0 %v599
        %663 = vmatprep.subr.mxu0 %v598
        %664 = vmatpush2.msra.mxu0 %v597
        %665 = vmatprep.subr.mxu0 %v596
        %666 = vmatpush2.msra.mxu0 %v595
        %667 = vmatprep.subr.mxu0 %v594
        %668 = vmatpush2.msra.mxu0 %v593
        %669 = vmatprep.subr.mxu0 %v592
        %670 = vmatpush2.msra.mxu0 %v591
        %671 = vmatprep.subr.mxu0 %v590
        %672 = vmatpush2.msra.mxu0 %v589
        %673 = vmatprep.subr.mxu0 %v588
        %674 = vmatpush2.msra.mxu0 %v587
        %675 = vmatprep.subr.mxu0 %v586
        %676 = vmatpush2.msra.mxu0 %v585
        %677 = vmatprep.subr.mxu0 %v584
        %678 = vmatpush2.msra.mxu0 %v583
        %679 = vmatprep.mubr.f32.mxu0 %v316
        %680 = vmatmul.mubr.f32.gmra.mxu0 %v248
        %v681 = vpop.f32.mrf.mxu0
        %v682 = vadd.f32 0.0, %v681
        %v683 = vpop.f32.mrf.mxu0
        %v684 = vadd.f32 0.0, %v683
        %685 = vdwg.mxu0
        %s686 = scalar_lea.vmem %s1, 8
        %v687 = vld [vmem:[%s686] sm:$0xff]
        %v689 = vsel %vm390, %v687, 0
        %v692 = vsel %vm394, %v682, 0
        %v695 = vsel %vm394, %v684, 0
        %697 = vmatprep.subr.mxu0 0.0
        %698 = vmatpush1.msra.mxu0 0.0
        %699 = vmatprep.subr.mxu0 0.0
        %700 = vmatpush1.msra.mxu0 0.0
        %701 = vmatprep.subr.mxu0 0.0
        %702 = vmatpush1.msra.mxu0 0.0
        %703 = vmatprep.subr.mxu0 0.0
        %704 = vmatpush1.msra.mxu0 0.0
        %705 = vmatprep.subr.mxu0 0.0
        %706 = vmatpush1.msra.mxu0 0.0
        %707 = vmatprep.subr.mxu0 0.0
        %708 = vmatpush1.msra.mxu0 0.0
        %709 = vmatprep.subr.mxu0 0.0
        %710 = vmatpush1.msra.mxu0 0.0
        %711 = vmatprep.subr.mxu0 0.0
        %712 = vmatpush1.msra.mxu0 0.0
        %713 = vmatprep.subr.mxu0 0.0
        %714 = vmatpush1.msra.mxu0 0.0
        %715 = vmatprep.subr.mxu0 0.0
        %716 = vmatpush1.msra.mxu0 0.0
        %717 = vmatprep.subr.mxu0 0.0
        %718 = vmatpush1.msra.mxu0 0.0
        %719 = vmatprep.subr.mxu0 0.0
        %720 = vmatpush1.msra.mxu0 0.0
        %721 = vmatprep.subr.mxu0 0.0
        %722 = vmatpush1.msra.mxu0 0.0
        %723 = vmatprep.subr.mxu0 0.0
        %724 = vmatpush1.msra.mxu0 0.0
        %725 = vmatprep.subr.mxu0 0.0
        %726 = vmatpush1.msra.mxu0 0.0
        %727 = vmatprep.subr.mxu0 %v695
        %728 = vmatpush1.msra.mxu0 %v692
        %729 = vmatprep.subr.mxu0 0.0
        %730 = vmatpush2.msra.mxu0 0.0
        %731 = vmatprep.subr.mxu0 0.0
        %732 = vmatpush2.msra.mxu0 0.0
        %733 = vmatprep.subr.mxu0 0.0
        %734 = vmatpush2.msra.mxu0 0.0
        %735 = vmatprep.subr.mxu0 0.0
        %736 = vmatpush2.msra.mxu0 0.0
        %737 = vmatprep.subr.mxu0 0.0
        %738 = vmatpush2.msra.mxu0 0.0
        %739 = vmatprep.subr.mxu0 0.0
        %740 = vmatpush2.msra.mxu0 0.0
        %741 = vmatprep.subr.mxu0 0.0
        %742 = vmatpush2.msra.mxu0 0.0
        %743 = vmatprep.subr.mxu0 0.0
        %744 = vmatpush2.msra.mxu0 0.0
        %745 = vmatprep.subr.mxu0 0.0
        %746 = vmatpush2.msra.mxu0 0.0
        %747 = vmatprep.subr.mxu0 0.0
        %748 = vmatpush2.msra.mxu0 0.0
        %749 = vmatprep.subr.mxu0 0.0
        %750 = vmatpush2.msra.mxu0 0.0
        %751 = vmatprep.subr.mxu0 0.0
        %752 = vmatpush2.msra.mxu0 0.0
        %753 = vmatprep.subr.mxu0 0.0
        %754 = vmatpush2.msra.mxu0 0.0
        %755 = vmatprep.subr.mxu0 0.0
        %756 = vmatpush2.msra.mxu0 0.0
        %757 = vmatprep.subr.mxu0 0.0
        %758 = vmatpush2.msra.mxu0 0.0
        %759 = vmatprep.subr.mxu0 0.0
        %760 = vmatpush2.msra.mxu0 0.0
        %761 = vmatprep.mubr.f32.mxu0 0.0
        %762 = vmatmul.mubr.f32.gmra.mxu0 %v689
        %v763 = vpop.f32.mrf.mxu0
        %v764 = vadd.f32 0.0, %v763
        %v765 = vpop.f32.mrf.mxu0
        %v766 = vadd.f32 0.0, %v765
        %767 = vdwg.mxu0
        %v768 = vadd.f32 %v546, %v764
        %v769 = vadd.f32 %v548, %v766
        %s770 = scalar_lea.vmem [#allocation2], 1024
        %v771 = vld [vmem:[%s770] sm:$0xff]
        %v772 = vld [vmem:[%s770 + $0x8] sm:$0xff]
        %v773 = vld [vmem:[%s770 + $0x10] sm:$0xff]
        %v774 = vld [vmem:[%s770 + $0x18] sm:$0xff]
        %v775 = vld [vmem:[%s770 + $0x20] sm:$0xff]
        %v776 = vld [vmem:[%s770 + $0x28] sm:$0xff]
        %v777 = vld [vmem:[%s770 + $0x30] sm:$0xff]
        %v778 = vld [vmem:[%s770 + $0x38] sm:$0xff]
        %v779 = vld [vmem:[%s770 + $0x40] sm:$0xff]
        %v780 = vld [vmem:[%s770 + $0x48] sm:$0xff]
        %v781 = vld [vmem:[%s770 + $0x50] sm:$0xff]
        %v782 = vld [vmem:[%s770 + $0x58] sm:$0xff]
        %v783 = vld [vmem:[%s770 + $0x60] sm:$0xff]
        %v784 = vld [vmem:[%s770 + $0x68] sm:$0xff]
        %v785 = vld [vmem:[%s770 + $0x70] sm:$0xff]
        %v786 = vld [vmem:[%s770 + $0x78] sm:$0xff]
        %v787 = vld [vmem:[%s770 + $0x80] sm:$0xff]
        %v788 = vld [vmem:[%s770 + $0x88] sm:$0xff]
        %v789 = vld [vmem:[%s770 + $0x90] sm:$0xff]
        %v790 = vld [vmem:[%s770 + $0x98] sm:$0xff]
        %v791 = vld [vmem:[%s770 + $0xa0] sm:$0xff]
        %v792 = vld [vmem:[%s770 + $0xa8] sm:$0xff]
        %v793 = vld [vmem:[%s770 + $0xb0] sm:$0xff]
        %v794 = vld [vmem:[%s770 + $0xb8] sm:$0xff]
        %v795 = vld [vmem:[%s770 + $0xc0] sm:$0xff]
        %v796 = vld [vmem:[%s770 + $0xc8] sm:$0xff]
        %v797 = vld [vmem:[%s770 + $0xd0] sm:$0xff]
        %v798 = vld [vmem:[%s770 + $0xd8] sm:$0xff]
        %v799 = vld [vmem:[%s770 + $0xe0] sm:$0xff]
        %v800 = vld [vmem:[%s770 + $0xe8] sm:$0xff]
        %v801 = vld [vmem:[%s770 + $0xf0] sm:$0xff]
        %v802 = vld [vmem:[%s770 + $0xf8] sm:$0xff]
        %v803 = vld [vmem:[%s770 + $0x100] sm:$0xff]
        %v804 = vld [vmem:[%s770 + $0x108] sm:$0xff]
        %v805 = vld [vmem:[%s770 + $0x110] sm:$0xff]
        %v806 = vld [vmem:[%s770 + $0x118] sm:$0xff]
        %v807 = vld [vmem:[%s770 + $0x120] sm:$0xff]
        %v808 = vld [vmem:[%s770 + $0x128] sm:$0xff]
        %v809 = vld [vmem:[%s770 + $0x130] sm:$0xff]
        %v810 = vld [vmem:[%s770 + $0x138] sm:$0xff]
        %v811 = vld [vmem:[%s770 + $0x140] sm:$0xff]
        %v812 = vld [vmem:[%s770 + $0x148] sm:$0xff]
        %v813 = vld [vmem:[%s770 + $0x150] sm:$0xff]
        %v814 = vld [vmem:[%s770 + $0x158] sm:$0xff]
        %v815 = vld [vmem:[%s770 + $0x160] sm:$0xff]
        %v816 = vld [vmem:[%s770 + $0x168] sm:$0xff]
        %v817 = vld [vmem:[%s770 + $0x170] sm:$0xff]
        %v818 = vld [vmem:[%s770 + $0x178] sm:$0xff]
        %v819 = vld [vmem:[%s770 + $0x180] sm:$0xff]
        %v820 = vld [vmem:[%s770 + $0x188] sm:$0xff]
        %v821 = vld [vmem:[%s770 + $0x190] sm:$0xff]
        %v822 = vld [vmem:[%s770 + $0x198] sm:$0xff]
        %v823 = vld [vmem:[%s770 + $0x1a0] sm:$0xff]
        %v824 = vld [vmem:[%s770 + $0x1a8] sm:$0xff]
        %v825 = vld [vmem:[%s770 + $0x1b0] sm:$0xff]
        %v826 = vld [vmem:[%s770 + $0x1b8] sm:$0xff]
        %v827 = vld [vmem:[%s770 + $0x1c0] sm:$0xff]
        %v828 = vld [vmem:[%s770 + $0x1c8] sm:$0xff]
        %v829 = vld [vmem:[%s770 + $0x1d0] sm:$0xff]
        %v830 = vld [vmem:[%s770 + $0x1d8] sm:$0xff]
        %v831 = vld [vmem:[%s770 + $0x1e0] sm:$0xff]
        %v832 = vld [vmem:[%s770 + $0x1e8] sm:$0xff]
        %v833 = vld [vmem:[%s770 + $0x1f0] sm:$0xff]
        %v834 = vld [vmem:[%s770 + $0x1f8] sm:$0xff]
        %835 = vmatprep.subr.mxu0 %v802
        %836 = vmatpush1.msra.mxu0 %v801
        %837 = vmatprep.subr.mxu0 %v800
        %838 = vmatpush1.msra.mxu0 %v799
        %839 = vmatprep.subr.mxu0 %v798
        %840 = vmatpush1.msra.mxu0 %v797
        %841 = vmatprep.subr.mxu0 %v796
        %842 = vmatpush1.msra.mxu0 %v795
        %843 = vmatprep.subr.mxu0 %v794
        %844 = vmatpush1.msra.mxu0 %v793
        %845 = vmatprep.subr.mxu0 %v792
        %846 = vmatpush1.msra.mxu0 %v791
        %847 = vmatprep.subr.mxu0 %v790
        %848 = vmatpush1.msra.mxu0 %v789
        %849 = vmatprep.subr.mxu0 %v788
        %850 = vmatpush1.msra.mxu0 %v787
        %851 = vmatprep.subr.mxu0 %v786
        %852 = vmatpush1.msra.mxu0 %v785
        %853 = vmatprep.subr.mxu0 %v784
        %854 = vmatpush1.msra.mxu0 %v783
        %855 = vmatprep.subr.mxu0 %v782
        %856 = vmatpush1.msra.mxu0 %v781
        %857 = vmatprep.subr.mxu0 %v780
        %858 = vmatpush1.msra.mxu0 %v779
        %859 = vmatprep.subr.mxu0 %v778
        %860 = vmatpush1.msra.mxu0 %v777
        %861 = vmatprep.subr.mxu0 %v776
        %862 = vmatpush1.msra.mxu0 %v775
        %863 = vmatprep.subr.mxu0 %v774
        %864 = vmatpush1.msra.mxu0 %v773
        %865 = vmatprep.subr.mxu0 %v772
        %866 = vmatpush1.msra.mxu0 %v771
        %867 = vmatprep.subr.mxu0 %v834
        %868 = vmatpush2.msra.mxu0 %v833
        %869 = vmatprep.subr.mxu0 %v832
        %870 = vmatpush2.msra.mxu0 %v831
        %871 = vmatprep.subr.mxu0 %v830
        %872 = vmatpush2.msra.mxu0 %v829
        %873 = vmatprep.subr.mxu0 %v828
        %874 = vmatpush2.msra.mxu0 %v827
        %875 = vmatprep.subr.mxu0 %v826
        %876 = vmatpush2.msra.mxu0 %v825
        %877 = vmatprep.subr.mxu0 %v824
        %878 = vmatpush2.msra.mxu0 %v823
        %879 = vmatprep.subr.mxu0 %v822
        %880 = vmatpush2.msra.mxu0 %v821
        %881 = vmatprep.subr.mxu0 %v820
        %882 = vmatpush2.msra.mxu0 %v819
        %883 = vmatprep.subr.mxu0 %v818
        %884 = vmatpush2.msra.mxu0 %v817
        %885 = vmatprep.subr.mxu0 %v816
        %886 = vmatpush2.msra.mxu0 %v815
        %887 = vmatprep.subr.mxu0 %v814
        %888 = vmatpush2.msra.mxu0 %v813
        %889 = vmatprep.subr.mxu0 %v812
        %890 = vmatpush2.msra.mxu0 %v811
        %891 = vmatprep.subr.mxu0 %v810
        %892 = vmatpush2.msra.mxu0 %v809
        %893 = vmatprep.subr.mxu0 %v808
        %894 = vmatpush2.msra.mxu0 %v807
        %895 = vmatprep.subr.mxu0 %v806
        %896 = vmatpush2.msra.mxu0 %v805
        %897 = vmatprep.subr.mxu0 %v804
        %898 = vmatpush2.msra.mxu0 %v803
        %899 = vmatprep.mubr.f32.mxu0 %v316
        %900 = vmatmul.mubr.f32.gmra.mxu0 %v248
        %v901 = vpop.f32.mrf.mxu0
        %v902 = vadd.f32 0.0, %v901
        %v903 = vpop.f32.mrf.mxu0
        %v904 = vadd.f32 0.0, %v903
        %905 = vdwg.mxu0
        %s906 = scalar_lea.vmem %s1, 16
        %v907 = vld [vmem:[%s906] sm:$0xff]
        %v909 = vsel %vm390, %v907, 0
        %v912 = vsel %vm394, %v902, 0
        %v915 = vsel %vm394, %v904, 0
        %917 = vmatprep.subr.mxu0 0.0
        %918 = vmatpush1.msra.mxu0 0.0
        %919 = vmatprep.subr.mxu0 0.0
        %920 = vmatpush1.msra.mxu0 0.0
        %921 = vmatprep.subr.mxu0 0.0
        %922 = vmatpush1.msra.mxu0 0.0
        %923 = vmatprep.subr.mxu0 0.0
        %924 = vmatpush1.msra.mxu0 0.0
        %925 = vmatprep.subr.mxu0 0.0
        %926 = vmatpush1.msra.mxu0 0.0
        %927 = vmatprep.subr.mxu0 0.0
        %928 = vmatpush1.msra.mxu0 0.0
        %929 = vmatprep.subr.mxu0 0.0
        %930 = vmatpush1.msra.mxu0 0.0
        %931 = vmatprep.subr.mxu0 0.0
        %932 = vmatpush1.msra.mxu0 0.0
        %933 = vmatprep.subr.mxu0 0.0
        %934 = vmatpush1.msra.mxu0 0.0
        %935 = vmatprep.subr.mxu0 0.0
        %936 = vmatpush1.msra.mxu0 0.0
        %937 = vmatprep.subr.mxu0 0.0
        %938 = vmatpush1.msra.mxu0 0.0
        %939 = vmatprep.subr.mxu0 0.0
        %940 = vmatpush1.msra.mxu0 0.0
        %941 = vmatprep.subr.mxu0 0.0
        %942 = vmatpush1.msra.mxu0 0.0
        %943 = vmatprep.subr.mxu0 0.0
        %944 = vmatpush1.msra.mxu0 0.0
        %945 = vmatprep.subr.mxu0 0.0
        %946 = vmatpush1.msra.mxu0 0.0
        %947 = vmatprep.subr.mxu0 %v915
        %948 = vmatpush1.msra.mxu0 %v912
        %949 = vmatprep.subr.mxu0 0.0
        %950 = vmatpush2.msra.mxu0 0.0
        %951 = vmatprep.subr.mxu0 0.0
        %952 = vmatpush2.msra.mxu0 0.0
        %953 = vmatprep.subr.mxu0 0.0
        %954 = vmatpush2.msra.mxu0 0.0
        %955 = vmatprep.subr.mxu0 0.0
        %956 = vmatpush2.msra.mxu0 0.0
        %957 = vmatprep.subr.mxu0 0.0
        %958 = vmatpush2.msra.mxu0 0.0
        %959 = vmatprep.subr.mxu0 0.0
        %960 = vmatpush2.msra.mxu0 0.0
        %961 = vmatprep.subr.mxu0 0.0
        %962 = vmatpush2.msra.mxu0 0.0
        %963 = vmatprep.subr.mxu0 0.0
        %964 = vmatpush2.msra.mxu0 0.0
        %965 = vmatprep.subr.mxu0 0.0
        %966 = vmatpush2.msra.mxu0 0.0
        %967 = vmatprep.subr.mxu0 0.0
        %968 = vmatpush2.msra.mxu0 0.0
        %969 = vmatprep.subr.mxu0 0.0
        %970 = vmatpush2.msra.mxu0 0.0
        %971 = vmatprep.subr.mxu0 0.0
        %972 = vmatpush2.msra.mxu0 0.0
        %973 = vmatprep.subr.mxu0 0.0
        %974 = vmatpush2.msra.mxu0 0.0
        %975 = vmatprep.subr.mxu0 0.0
        %976 = vmatpush2.msra.mxu0 0.0
        %977 = vmatprep.subr.mxu0 0.0
        %978 = vmatpush2.msra.mxu0 0.0
        %979 = vmatprep.subr.mxu0 0.0
        %980 = vmatpush2.msra.mxu0 0.0
        %981 = vmatprep.mubr.f32.mxu0 0.0
        %982 = vmatmul.mubr.f32.gmra.mxu0 %v909
        %v983 = vpop.f32.mrf.mxu0
        %v984 = vadd.f32 0.0, %v983
        %v985 = vpop.f32.mrf.mxu0
        %v986 = vadd.f32 0.0, %v985
        %987 = vdwg.mxu0
        %v988 = vadd.f32 %v768, %v984
        %v989 = vadd.f32 %v769, %v986
        %v990 = vadd.f32 %v988, %v246
        %v991 = vadd.f32 %v989, %v246
        %v992 = vmax.f32 %v990, 0.0
        %v993 = vmax.f32 %v991, 0.0
        %994 = vst [vmem:[%s230] sm:$0xff] %v992
        %995 = vst [vmem:[%s230 + $0x8] sm:$0xff] %v993
        %s996 = sand.u32 %s132, 1
        %s997 = scalar_lea.sflag [#allocation4], %s996
        %s998 = sand.u32 %s132, 1
        %s999 = smul.addr %s998, 16
        %s1000 = scalar_lea.vmem [#allocation5], %s999
        // Predicated region
        $region41: #{tpu_custom_call.1} parent=35 // pred_check
          %p1001 = pneg %p142
        $region42: #{tpu_custom_call.1} parent=35 // pred_check_branch
          %1003 = sbr.rel (%p1001) target = $region44
        $region43: #{tpu_custom_call.1} parent=35 // pred_region
          %s1004 = smul.u32 2, %s24
          %s1006 = ssub.s32 256, 256
          %1007 = vsyncadd %s997, %s1006
          %s1008 = smul.addr %s23, 2
          %s1009 = sadd.s32 %s1004, %s1008
          %s1010 = smul.addr %s1009, 128
          %s1011 = scalar_lea.hbm %s4, %s1010
          %s1013 = sshll.u32 %s1000, 4
          %s1014 = int_to_ptr.vmem [resolvable:$true] %s1013
          %1016 = dma.vmem_to_hbm [thread:$0]  %s1014, 256, %s1011, %s997
        $region44: #{tpu_custom_call.1} parent=35 // pred_fallthru
          _
      $region36: #{tpu_custom_call.1} parent=5 // pred_fallthru
        _
      %p1017 = scmp.le.s32.totalorder 2, %s14
      // Predicated region
      $region45: #{tpu_custom_call.1} parent=5 // pred_check
        %p1018 = pneg %p1017
      $region46: #{tpu_custom_call.1} parent=5 // pred_check_branch
        %1020 = sbr.rel (%p1018) target = $region48
      $region47: #{tpu_custom_call.1} parent=5 // pred_region
        %s1021 = ssub.s32 %s14, 2
        // Predicated region
        $region49: #{tpu_custom_call.1} parent=47 // pred_check
          %p1022 = pneg %p148
        $region50: #{tpu_custom_call.1} parent=47 // pred_check_branch
          %1024 = sbr.rel (%p1022) target = $region52
        $region51: #{tpu_custom_call.1} parent=47 // pred_region
          %s1025 = sand.u32 %s133, 1
          %s1026 = scalar_lea.sflag [#allocation4], %s1025
          %s1027 = sand.u32 %s133, 1
          %s1028 = smul.addr %s1027, 16
          %s1029 = scalar_lea.vmem [#allocation5], %s1028
          %1030 = dma.done %s1026, 256
        $region52: #{tpu_custom_call.1} parent=47 // pred_fallthru
          _
      $region48: #{tpu_custom_call.1} parent=5 // pred_fallthru
        _
    $region6: #{tpu_custom_call.1} parent=1 // loop_footer
      %s18 = sadd.s32 1, %s14
    $region7: #{tpu_custom_call.1} parent=1 // loop_footer_branch
      %13 = sbr.rel target = $region3
    $region8: #{tpu_custom_call.1} parent=1 // loop_exit
      _
    %1031 = vsyncpa [#allocation3], 1
    %s1032 = scalar_lea.sflag [#allocation3], 1
    %1033 = vsyncpa %s1032, 1
    %1034 = vsyncpa [#allocation4], 1
    %s1035 = scalar_lea.sflag [#allocation4], 1
    %1036 = vsyncpa %s1035, 1

</llo_original>
